<compile_context>
chip_gen: v5e
topology: v5e:2x2
jax: 0.10.0
libtpu: 0.0.40
codegen_flags: <defaults>
</compile_context>

<pallas_src>
import functools

import jax
import jax.numpy as jnp
import numpy as np
from jax.experimental import pallas as pl
from jax.experimental.pallas import tpu as pltpu


# ---------------------------------------------------------------------------
# Small helpers
# ---------------------------------------------------------------------------
def _round_up(n, m):
    return ((n + m - 1) // m) * m


def _vmem_capacity():
    try:
        return int(pltpu.get_tpu_info().vmem_capacity_bytes)
    except Exception:
        return 64 << 20            # conservative: v7x per-core physical VMEM


def _vmem_limit(est_bytes, cap):
    hi = max(32 << 20, cap - (8 << 20))
    return int(min(hi, max(32 << 20, est_bytes + (8 << 20))))


def _pick_rows(b_pad, target):
    """Row-block size: multiple of 8 that divides b_pad, >=2 blocks when possible
    (so the 'parallel' grid axis can be sharded across TensorCores)."""
    t = min(b_pad, max(8, (target // 8) * 8))
    if b_pad >= 16:
        t = min(t, max(8, (b_pad // 2) // 8 * 8))
    while b_pad % t:
        t -= 8
    return t


def _choose_batch_all_tiles(b_pad, slab_budget, chunk_rows):
    """Pick (anchor chunk Tc, negative-axis chunk Kc) so that ~3 live
    (Tc, B, Kc) f32 slabs stay under slab_budget."""
    if 3 * 8 * b_pad * b_pad * 4 <= slab_budget:
        kc = b_pad                                    # no inner k-chunking needed
    else:
        kc = None
        for cand in (512, 384, 256, 128):             # lane-aligned, divides b_pad
            if cand < b_pad and b_pad % cand == 0 and 3 * 8 * b_pad * cand * 4 <= slab_budget:
                kc = cand
                break
        if kc is None:
            kc = 128 if b_pad % 128 == 0 else b_pad
    if chunk_rows is not None:
        tc = min(b_pad, max(8, (int(chunk_rows) // 8) * 8))
    else:
        tc = (slab_budget // (3 * b_pad * kc * 4)) // 8 * 8
        tc = max(8, min(tc, 512, b_pad))
        if b_pad >= 16:
            tc = min(tc, max(8, (b_pad // 2) // 8 * 8))
    while b_pad % tc:
        tc -= 8
    return tc, kc


def _sum_to_11(t):
    """Reduce a 2-D / 3-D f32 array to shape (1, 1)."""
    if t.ndim == 3:
        t = jnp.sum(t, axis=2)                        # (R, B)
    t = jnp.sum(t, axis=1, keepdims=True)             # (R, 1)
    return jnp.sum(t, axis=0, keepdims=True)          # (1, 1)


# ---------------------------------------------------------------------------
# Kernel 1 (shared): pairwise (squared) euclidean distances, row-block grid.
# ---------------------------------------------------------------------------
def _pairwise_dist_kernel(norm_col_ref, norm_row_ref, xr_ref, xa_ref, out_ref,
                          *, squared):
    # Gram rows on the MXU in the embeddings' native dtype (bf16 stays bf16).
    cor = jax.lax.dot_general(xr_ref[...], xa_ref[...], (((1,), (1,)), ((), ())),
                              preferred_element_type=jnp.float32)       # (Tr, B)
    d = jnp.maximum(norm_col_ref[...] - 2.0 * cor + norm_row_ref[...], 0.0)
    if not squared:
        zmask = (d == 0.0).astype(jnp.float32)
        d = jnp.sqrt(d + zmask * 1e-16) * (1.0 - zmask)
    out_ref[...] = d


# ---------------------------------------------------------------------------
# Kernel 2a: hardest=False (batch-all), parallel anchor-chunk grid +
#            inner fori_loop over negative-axis (k) column blocks.
# ---------------------------------------------------------------------------
def _batch_all_kernel(lab_i_ref, lab_row_ref, valid_row_ref, d_ref,
                      tot_ref, cnt_ref, *, margin, kc):
    tc, b = d_ref.shape
    c = pl.program_id(0)
    big = jnp.float32(1e30)

    d_chunk = d_ref[...]                                   # (tc, b) f32
    lab_i = lab_i_ref[...]                                 # (tc, 1) labels of anchors
    eq_i = lab_i == lab_row_ref[...]                       # (tc, b)

    i_ids = c * tc + jax.lax.broadcasted_iota(jnp.int32, (tc, b), 0)
    col_ids = jax.lax.broadcasted_iota(jnp.int32, (tc, b), 1)
    pos2d = jnp.logical_and(i_ids != col_ids, eq_i)        # i != j and same label
    # Fold margin + positive-mask into 2D; -BIG sentinels are killed by relu.
    a_pos = jnp.where(pos2d, d_chunk + jnp.float32(margin), -big)   # (tc, b)

    def accum(d_k, neg2d, tot, cnt):
        a_neg = jnp.where(neg2d, d_k, big)                 # (tc, kcols)
        # Only cube-wide ops left: subtract, relu, sums, count compare/select.
        tl = jnp.maximum(a_pos[:, :, None] - a_neg[:, None, :], 0.0)
        tot = tot + _sum_to_11(tl)
        cnt = cnt + _sum_to_11(jnp.where(tl > 1e-16,
                                         jnp.float32(1.0), jnp.float32(0.0)))
        return tot, cnt

    z = jnp.zeros((1, 1), jnp.float32)
    if kc == b:
        neg2d = jnp.logical_and(jnp.logical_not(eq_i), valid_row_ref[...] != 0.0)
        tot, cnt = accum(d_chunk, neg2d, z, z)
    else:
        def kbody(ki, carry):
            k0 = pl.multiple_of(ki * kc, kc)
            d_k = d_ref[:, pl.ds(k0, kc)]
            eq_k = lab_i == lab_row_ref[:, pl.ds(k0, kc)]
            neg2d = jnp.logical_and(jnp.logical_not(eq_k),
                                    valid_row_ref[:, pl.ds(k0, kc)] != 0.0)
            return accum(d_k, neg2d, *carry)
        tot, cnt = jax.lax.fori_loop(0, b // kc, kbody, (z, z))

    tot_ref[...] = tot.reshape(1, 1, 1)
    cnt_ref[...] = cnt.reshape(1, 1, 1)


# ---------------------------------------------------------------------------
# Kernel 2b: hardest=True (batch-hard), parallel anchor-row-block grid.
# ---------------------------------------------------------------------------
def _batch_hard_kernel(lab_i_ref, lab_row_ref, valid_i_ref, valid_row_ref,
                       d_ref, out_ref):
    tr, b = d_ref.shape
    d = d_ref[...]                                          # (tr, b) f32
    eq = lab_i_ref[...] == lab_row_ref[...]                 # (tr, b) bool
    row0 = pl.program_id(0) * tr
    i_ids = row0 + jax.lax.broadcasted_iota(jnp.int32, (tr, b), 0)
    col_ids = jax.lax.broadcasted_iota(jnp.int32, (tr, b), 1)
    not_self = i_ids != col_ids
    valid_r = valid_row_ref[...] != 0.0                     # (1, b) real columns

    # Hardest positive per anchor (padded columns excluded by sentinel labels).
    mask_ap = jnp.logical_and(not_self, eq)
    hardest_pos = jnp.max(jnp.where(mask_ap, d, 0.0), axis=1, keepdims=True)

    # Hardest negative per anchor (padded columns excluded exactly).
    mask_an = jnp.logical_and(jnp.logical_not(eq), valid_r)
    max_an = jnp.max(jnp.where(valid_r, d, 0.0), axis=1, keepdims=True)
    anchor_neg = d + max_an * (1.0 - mask_an.astype(jnp.float32))
    hardest_neg = jnp.min(anchor_neg, axis=1, keepdims=True)

    # The PyTorch module hard-codes +0.1 here (not self.margin); keep parity.
    tl = jnp.maximum(hardest_pos - hardest_neg + jnp.float32(0.1), 0.0)
    out_ref[...] = tl * valid_i_ref[...]                    # zero padded anchors


# ---------------------------------------------------------------------------
# Wrapper
# ---------------------------------------------------------------------------
def hard_triplet_loss(embeddings, labels, *, margin=0.1, hardest=False,
                      squared=False, chunk_rows=None):
    """JAX/Pallas equivalent of HardTripletLoss(margin, hardest, squared)(embeddings, labels)."""
    embeddings = jnp.asarray(embeddings)
    if embeddings.dtype not in (jnp.float32, jnp.bfloat16):
        embeddings = embeddings.astype(jnp.float32)
    labels = jnp.asarray(labels).astype(jnp.int32).reshape(-1)
    B, D = embeddings.shape
    itemsize = jnp.dtype(embeddings.dtype).itemsize

    # Generation-aware VMEM budgets.
    cap = _vmem_capacity()
    slab_budget = int(min(40 << 20, max(12 << 20, int(cap * 0.30))))

    # Pad D to a lane-dense multiple of 128 (zero columns: exact) and B to a
    # multiple of 8 (16 for bf16: 2 rows/sublane).  When the batch-all branch
    # will need k-axis chunking, pad B to a multiple of 128 so lane slices
    # stay aligned.  Padded rows get unique sentinel labels + validity masks.
    row_align = 16 if embeddings.dtype == jnp.bfloat16 else 8
    B_pad = _round_up(B, row_align)
    D_pad = _round_up(D, 128)
    if (not hardest) and 3 * 8 * B_pad * B_pad * 4 > slab_budget:
        B_pad = _round_up(B_pad, 128)

    if B_pad != B or D_pad != D:
        emb_p = jnp.zeros((B_pad, D_pad), embeddings.dtype).at[:B, :D].set(embeddings)
    else:
        emb_p = embeddings
    npad = B_pad - B
    if npad:
        sentinels = jnp.max(labels) + 1 + jnp.arange(npad, dtype=jnp.int32)
        lab_p = jnp.concatenate([labels, sentinels])
    else:
        lab_p = labels
    valid = (jnp.arange(B_pad) < B).astype(jnp.float32)

    lab_col = lab_p.reshape(B_pad, 1)
    lab_row = lab_p.reshape(1, B_pad)
    valid_col = valid.reshape(B_pad, 1)
    valid_row = valid.reshape(1, B_pad)

    # Squared norms: trivial O(B*D) pre-reduction (replaces the in-kernel
    # eye-mask diagonal extraction).
    x32 = emb_p.astype(jnp.float32)
    norm = jnp.sum(x32 * x32, axis=1)
    norm_col = norm.reshape(B_pad, 1)
    norm_row = norm.reshape(1, B_pad)

    # ---- call 1: pairwise distances (B_pad, B_pad) f32, row-block parallel ----
    tr_d = _pick_rows(B_pad, 256)
    est1 = (2 * tr_d * D_pad * itemsize + 2 * B_pad * D_pad * itemsize
            + 2 * tr_d * B_pad * 4 + 4 * tr_d * B_pad * 4 + (1 << 20))
    dist = pl.pallas_call(
        functools.partial(_pairwise_dist_kernel, squared=bool(squared)),
        out_shape=jax.ShapeDtypeStruct((B_pad, B_pad), jnp.float32),
        grid=(B_pad // tr_d,),
        in_specs=[
            pl.BlockSpec((tr_d, 1), lambda r: (r, 0)),        # norms of row block
            pl.BlockSpec((1, B_pad), lambda r: (0, 0)),       # norms of all rows
            pl.BlockSpec((tr_d, D_pad), lambda r: (r, 0)),    # embedding row block
            pl.BlockSpec((B_pad, D_pad), lambda r: (0, 0)),   # all embeddings (resident)
        ],
        out_specs=pl.BlockSpec((tr_d, B_pad), lambda r: (r, 0)),
        compiler_params=pltpu.CompilerParams(
            dimension_semantics=("parallel",),
            vmem_limit_bytes=_vmem_limit(est1, cap)),
    )(norm_col, norm_row, emb_p, emb_p)

    if hardest:
        # ---- call 2b: per-anchor batch-hard loss, row-block parallel ----
        tr_h = _pick_rows(B_pad, 512)
        est3 = 8 * tr_h * B_pad * 4 + (1 << 20)
        per_anchor = pl.pallas_call(
            _batch_hard_kernel,
            out_shape=jax.ShapeDtypeStruct((B_pad, 1), jnp.float32),
            grid=(B_pad // tr_h,),
            in_specs=[
                pl.BlockSpec((tr_h, 1), lambda r: (r, 0)),
                pl.BlockSpec((1, B_pad), lambda r: (0, 0)),
                pl.BlockSpec((tr_h, 1), lambda r: (r, 0)),
                pl.BlockSpec((1, B_pad), lambda r: (0, 0)),
                pl.BlockSpec((tr_h, B_pad), lambda r: (r, 0)),   # streamed dist rows
            ],
            out_specs=pl.BlockSpec((tr_h, 1), lambda r: (r, 0)),
            compiler_params=pltpu.CompilerParams(
                dimension_semantics=("parallel",),
                vmem_limit_bytes=_vmem_limit(est3, cap)),
        )(lab_col, lab_row, valid_col, valid_row, dist)
        return jnp.sum(per_anchor) / jnp.float32(B)

    # ---- call 2a: batch-all triplet loss, parallel anchor-chunk grid ----
    tc, kc = _choose_batch_all_tiles(B_pad, slab_budget, chunk_rows)
    num_chunks = B_pad // tc
    est2 = (2 * tc * B_pad * 4 + 3 * tc * B_pad * kc * 4
            + 8 * tc * B_pad * 4 + (1 << 20))
    tot, cnt = pl.pallas_call(
        functools.partial(_batch_all_kernel, margin=float(margin), kc=kc),
        out_shape=(jax.ShapeDtypeStruct((num_chunks, 1, 1), jnp.float32),
                   jax.ShapeDtypeStruct((num_chunks, 1, 1), jnp.float32)),
        grid=(num_chunks,),
        in_specs=[
            pl.BlockSpec((tc, 1), lambda c: (c, 0)),          # anchor labels (chunk)
            pl.BlockSpec((1, B_pad), lambda c: (0, 0)),       # all labels (resident)
            pl.BlockSpec((1, B_pad), lambda c: (0, 0)),       # validity of columns
            pl.BlockSpec((tc, B_pad), lambda c: (c, 0)),      # streamed dist rows
        ],
        out_specs=(pl.BlockSpec((1, 1, 1), lambda c: (c, 0, 0)),
                   pl.BlockSpec((1, 1, 1), lambda c: (c, 0, 0))),
        compiler_params=pltpu.CompilerParams(
            dimension_semantics=("parallel",),
            vmem_limit_bytes=_vmem_limit(est2, cap)),
    )(lab_col, lab_row, valid_row, dist)
    total = jnp.sum(tot)
    count = jnp.sum(cnt)
    return total / (count + jnp.float32(1e-16))


# ---------------------------------------------------------------------------
# Pure NumPy reference (mirrors the PyTorch module) for sanity checks.
# ---------------------------------------------------------------------------
def _ref_loss(emb, labels, margin=0.1, hardest=False, squared=False):
    emb = np.asarray(emb, np.float32)
    labels = np.asarray(labels)
    cor = emb @ emb.T
    norm = np.diag(cor)
    d = norm[:, None] - 2.0 * cor + norm[None, :]
    d = np.maximum(d, 0.0)
    if not squared:
        zm = (d == 0.0).astype(np.float32)
        d = np.sqrt(d + zm * 1e-16) * (1.0 - zm)
    B = emb.shape[0]
    not_eye = ~np.eye(B, dtype=bool)
    lab_eq = labels[:, None] == labels[None, :]
    if hardest:
        mask_ap = (not_eye & lab_eq).astype(np.float32)
        hp = np.max(d * mask_ap, axis=1, keepdims=True)
        mask_an = (~lab_eq).astype(np.float32)
        max_an = np.max(d, axis=1, keepdims=True)
        an = d + max_an * (1.0 - mask_an)
        hn = np.min(an, axis=1, keepdims=True)
        return np.mean(np.maximum(hp - hn + 0.1, 0.0))
    loss3 = d[:, :, None] - d[:, None, :] + margin
    distinct = not_eye[:, :, None] & not_eye[:, None, :] & not_eye[None, :, :]
    valid = lab_eq[:, :, None] & ~lab_eq[:, None, :]
    mask = (distinct & valid).astype(np.float32)
    tl = np.maximum(loss3 * mask, 0.0)
    nh = np.sum((tl > 1e-16).astype(np.float32))
    return np.sum(tl) / (nh + 1e-16)


if __name__ == "__main__":
    key = jax.random.PRNGKey(0)
    k1, k2 = jax.random.split(key)
    rtol = atol = 1e-2

    # --- aligned shapes; chunk_rows=8 exercises a 4-step anchor-chunk grid ---
    B, D = 32, 128
    emb = jax.random.normal(k1, (B, D), dtype=jnp.float32)
    labels = jnp.asarray(np.arange(B) % 8, dtype=jnp.int32)     # 8 classes x 4

    loss = jax.block_until_ready(
        hard_triplet_loss(emb, labels, margin=0.1, hardest=False,
                          squared=False, chunk_rows=8))
    ref = _ref_loss(np.asarray(emb), np.asarray(labels), 0.1, False, False)
    np.testing.assert_allclose(np.asarray(loss), ref, rtol=rtol, atol=atol)

    loss_sq = jax.block_until_ready(
        hard_triplet_loss(emb, labels, margin=0.1, hardest=False,
                          squared=True, chunk_rows=8))
    ref_sq = _ref_loss(np.asarray(emb), np.asarray(labels), 0.1, False, True)
    np.testing.assert_allclose(np.asarray(loss_sq), ref_sq, rtol=rtol, atol=atol)

    loss_h = jax.block_until_ready(
        hard_triplet_loss(emb, labels, margin=0.1, hardest=True, squared=False))
    ref_h = _ref_loss(np.asarray(emb), np.asarray(labels), 0.1, True, False)
    np.testing.assert_allclose(np.asarray(loss_h), ref_h, rtol=rtol, atol=atol)

    # --- unaligned shapes exercise the B/D padding + validity-mask path ---
    B2, D2 = 12, 100
    emb2 = jax.random.normal(k2, (B2, D2), dtype=jnp.float32)
    labels2 = jnp.asarray(np.arange(B2) % 4, dtype=jnp.int32)
    for h in (False, True):
        l2 = jax.block_until_ready(
            hard_triplet_loss(emb2, labels2, margin=0.1, hardest=h, squared=False))
        r2 = _ref_loss(np.asarray(emb2), np.asarray(labels2), 0.1, h, False)
        np.testing.assert_allclose(np.asarray(l2), r2, rtol=rtol, atol=atol)

    # --- bf16 smoke test: native MXU dtype path (no f32 upcast of the Gram) ---
    loss_bf = jax.block_until_ready(
        hard_triplet_loss(emb.astype(jnp.bfloat16), labels, margin=0.1,
                          hardest=False, squared=False, chunk_rows=16))
    assert np.isfinite(np.asarray(loss_bf))

    print("KERNEL_OK")
</pallas_src>

<mosaic_0001>
module attributes {stable_mosaic.version = 11 : i64} {
  func.func @_pairwise_dist_kernel(%arg0: i32, %arg1: memref<16x1xf32, #tpu.memory_space<vmem>>, %arg2: memref<1x32xf32, #tpu.memory_space<vmem>>, %arg3: memref<16x128xf32, #tpu.memory_space<vmem>>, %arg4: memref<32x128xf32, #tpu.memory_space<vmem>>, %arg5: memref<16x32xf32, #tpu.memory_space<vmem>>) attributes {dimension_semantics = [#tpu.dimension_semantics<parallel>], iteration_bounds = array<i64: 2>, scalar_prefetch = 0 : i64, scratch_operands = 0 : i64, tpu.core_type = #tpu.core_type<tc>, window_params = [{transform_indices = @transform_0, window_bounds = array<i64: 16, 1>}, {pipeline_mode = #tpu.pipeline_mode<synchronous>, transform_indices = @transform_1, window_bounds = array<i64: 1, 32>}, {transform_indices = @transform_2, window_bounds = array<i64: 16, 128>}, {pipeline_mode = #tpu.pipeline_mode<synchronous>, transform_indices = @transform_3, window_bounds = array<i64: 32, 128>}, {transform_indices = @transform_4, window_bounds = array<i64: 16, 32>}]} {
    %c0 = arith.constant 0 : index
    %c0_0 = arith.constant 0 : index
    %0 = vector.load %arg3[%c0, %c0_0] : memref<16x128xf32, #tpu.memory_space<vmem>>, vector<16x128xf32>
    %c0_1 = arith.constant 0 : index
    %c0_2 = arith.constant 0 : index
    %1 = vector.load %arg4[%c0_1, %c0_2] : memref<32x128xf32, #tpu.memory_space<vmem>>, vector<32x128xf32>
    %cst = arith.constant dense<0.000000e+00> : vector<16x32xf32>
    %2 = tpu.matmul %0, %1, %cst {dimension_numbers = #tpu.dot_dimension_numbers<[1], [1], [0], [0], [0, 0, 1, 0], [], []>} : vector<16x128xf32>, vector<32x128xf32>, vector<16x32xf32> -> vector<16x32xf32>
    %c0_3 = arith.constant 0 : index
    %c0_4 = arith.constant 0 : index
    %3 = vector.load %arg1[%c0_3, %c0_4] : memref<16x1xf32, #tpu.memory_space<vmem>>, vector<16x1xf32>
    %cst_5 = arith.constant 2.000000e+00 : f32
    %4 = vector.broadcast %cst_5 : f32 to vector<16x32xf32>
    %5 = arith.mulf %4, %2 : vector<16x32xf32>
    %6 = vector.broadcast %3 : vector<16x1xf32> to vector<16x32xf32>
    %7 = arith.subf %6, %5 : vector<16x32xf32>
    %c0_6 = arith.constant 0 : index
    %c0_7 = arith.constant 0 : index
    %8 = vector.load %arg2[%c0_6, %c0_7] : memref<1x32xf32, #tpu.memory_space<vmem>>, vector<1x32xf32>
    %9 = vector.broadcast %8 : vector<1x32xf32> to vector<16x32xf32>
    %10 = arith.addf %7, %9 : vector<16x32xf32>
    %cst_8 = arith.constant 0.000000e+00 : f32
    %11 = vector.broadcast %cst_8 : f32 to vector<16x32xf32>
    %12 = arith.maximumf %10, %11 : vector<16x32xf32>
    %cst_9 = arith.constant 0.000000e+00 : f32
    %13 = vector.broadcast %cst_9 : f32 to vector<16x32xf32>
    %14 = arith.cmpf oeq, %12, %13 : vector<16x32xf32>
    %15 = arith.extui %14 : vector<16x32xi1> to vector<16x32xi32>
    %16 = arith.sitofp %15 : vector<16x32xi32> to vector<16x32xf32>
    %cst_10 = arith.constant 1.000000e-16 : f32
    %17 = vector.broadcast %cst_10 : f32 to vector<16x32xf32>
    %18 = arith.mulf %16, %17 : vector<16x32xf32>
    %19 = arith.addf %12, %18 : vector<16x32xf32>
    %20 = math.sqrt %19 : vector<16x32xf32>
    %cst_11 = arith.constant 1.000000e+00 : f32
    %21 = vector.broadcast %cst_11 : f32 to vector<16x32xf32>
    %22 = arith.subf %21, %16 : vector<16x32xf32>
    %23 = arith.mulf %20, %22 : vector<16x32xf32>
    %c0_12 = arith.constant 0 : index
    %c0_13 = arith.constant 0 : index
    %24 = vector.load %arg5[%c0_12, %c0_13] : memref<16x32xf32, #tpu.memory_space<vmem>>, vector<16x32xf32>
    tpu.vector_store %arg5[%c0_12, %c0_13], %23 {strides = array<i32>} : memref<16x32xf32, #tpu.memory_space<vmem>>, vector<16x32xf32>,
    return
  }
  func.func @transform_0(%arg0: i32) -> (i32, i32) {
    %c0_i32 = arith.constant 0 : i32
    %c0_i32_0 = arith.constant 0 : i32
    return %arg0, %c0_i32 : i32, i32
  }
  func.func @transform_1(%arg0: i32) -> (i32, i32) {
    %c0_i32 = arith.constant 0 : i32
    %c0_i32_0 = arith.constant 0 : i32
    %c0_i32_1 = arith.constant 0 : i32
    return %c0_i32, %c0_i32_0 : i32, i32
  }
  func.func @transform_2(%arg0: i32) -> (i32, i32) {
    %c0_i32 = arith.constant 0 : i32
    %c0_i32_0 = arith.constant 0 : i32
    return %arg0, %c0_i32 : i32, i32
  }
  func.func @transform_3(%arg0: i32) -> (i32, i32) {
    %c0_i32 = arith.constant 0 : i32
    %c0_i32_0 = arith.constant 0 : i32
    %c0_i32_1 = arith.constant 0 : i32
    return %c0_i32, %c0_i32_0 : i32, i32
  }
  func.func @transform_4(%arg0: i32) -> (i32, i32) {
    %c0_i32 = arith.constant 0 : i32
    %c0_i32_0 = arith.constant 0 : i32
    return %arg0, %c0_i32 : i32, i32
  }
}

</mosaic_0001>

<llo_original>
// kernel: tpu_custom_call.1
$region0: #{tpu_custom_call.1}
  #allocation0 [shape = 'u32[]', space=smem, size = 0x4, offset = 0x4, fixed_abs, tag = 'smem constant byte address 0x4 - core index']
  #allocation1 [shape = 'u32[72,128]{1,0:T(1,128)}', space=vmem, size = 0x9000, scoped, tag = 'internal scratch']
  %s0 = inlined_call_operand.vmem [shape: f32[32,1], index: 0, kind: input, shape index: {}]
  %s1 = inlined_call_operand.vmem [shape: f32[1,32], index: 1, kind: input, shape index: {}]
  %s2 = inlined_call_operand.vmem [shape: f32[32,128], index: 2, kind: input, shape index: {}]
  %s3 = inlined_call_operand.hbm [shape: f32[32,128], index: 3, kind: input, shape index: {}]
  %s4 = inlined_call_operand.hbm [shape: f32[32,32], index: 4, kind: output, shape index: {}]
  %s5 = sld [smem:[#allocation0]]
  $region53: #{tpu_custom_call.1} parent=0
    _
  %s7 = ssub.s32 1, %s5
  %s8 = scalar_select 0, %s7, %s5
  $region1: #{tpu_custom_call.1} parent=0
    #allocation2 [shape = 'u8[16384]{0}', space=vmem, size = 0x4000, scoped, tag = 'input window, operand 3, single buffered']
    #allocation3 [shape = 's32[2]{0}', space=sflag, size = 0x8, scoped, tag = 'scoped memory for tpu_custom_call.1']
    #allocation4 [shape = 's32[2]{0}', space=sflag, size = 0x8, scoped, tag = 'scoped memory for tpu_custom_call.1']
    #allocation5 [shape = 'u8[16384]{0}', space=vmem, size = 0x4000, scoped, tag = 'output window, operand 0']
    %9 = vsyncpa [#allocation3], 0
    %10 = vsyncpa [#allocation4], 0
    %s11 = scalar_lea.sflag [#allocation4], 1
    %12 = vsyncpa %s11, 0
    loop: start=0, step=1, limit=4
    $region2: #{tpu_custom_call.1} parent=1 // loop_pre_header
      _
    $region3: #{tpu_custom_call.1} parent=1 // loop_header
      %s14 = sphi 0, %s18
      %p15 = scmp.ge.s32.totalorder %s14, 4
      %s24 = sphi 0, %s26
      %s27 = sphi 0, %s24
      %s28 = sphi 0, %s27
      %s44 = sphi 0, %s28
      %s48 = sphi 0, %s48
      %s50 = sphi 0, %s48
      %s51 = sphi 0, %s50
      %s65 = sphi 0, %s51
      %s71 = sphi 0, %s73
      %s74 = sphi 0, %s71
      %s75 = sphi 0, %s74
      %s91 = sphi 0, %s75
      %s95 = sphi 0, %s95
      %s97 = sphi 0, %s95
      %s98 = sphi 0, %s97
      %s112 = sphi 0, %s98
      %s118 = sphi 0, %s120
      %s121 = sphi 0, %s118
      %s122 = sphi 0, %s121
      %s138 = sphi 0, %s122
    $region4: #{tpu_custom_call.1} parent=1 // loop_header_branch
      %17 = sbr.rel (%p15) target = $region8
    $region5: #{tpu_custom_call.1} parent=1 // loop_body
      %s19 = ssub.s32 %s14, 1
      %s20 = ssub.s32 %s14, 2
      %s21 = sadd.s32 %s14, 1
      %s22 = ssub.s32 %s14, %s21
      %p23 = scmp.eq.s32.totalorder %s22, 0
      %s25 = sadd.s32 %s24, 1
      %s26 = scalar_select %p23, %s24, %s25
      %p29 = pneg %p23
      %p30 = scmp.eq.s32.totalorder %s14, 1
      %p31 = por %p29, %p30
      %p32 = scmp.ne.s32.totalorder %s24, %s27
      %p33 = scmp.eq.s32.totalorder %s14, 0
      %p34 = por %p32, %p33
      %p35 = scmp.ne.s32.totalorder %s24, %s27
      %p36 = scmp.eq.s32.totalorder %s19, 1
      %p37 = por %p35, %p36
      %p38 = scmp.ne.s32.totalorder %s27, %s28
      %p39 = scmp.eq.s32.totalorder %s19, 0
      %p40 = por %p38, %p39
      %p41 = scmp.ne.s32.totalorder %s27, %s28
      %p42 = scmp.eq.s32.totalorder %s20, 1
      %p43 = por %p41, %p42
      %p45 = scmp.ne.s32.totalorder %s28, %s44
      %p46 = scmp.eq.s32.totalorder %s20, 0
      %p47 = por %p45, %p46
      %s49 = sadd.s32 %s48, 1
      %p52 = scmp.eq.s32.totalorder %s14, 1
      %p53 = scmp.ne.s32.totalorder %s48, %s50
      %p54 = scmp.eq.s32.totalorder %s14, 0
      %p55 = por %p53, %p54
      %p56 = scmp.ne.s32.totalorder %s48, %s50
      %p57 = scmp.eq.s32.totalorder %s19, 1
      %p58 = por %p56, %p57
      %p59 = scmp.ne.s32.totalorder %s50, %s51
      %p60 = scmp.eq.s32.totalorder %s19, 0
      %p61 = por %p59, %p60
      %p62 = scmp.ne.s32.totalorder %s50, %s51
      %p63 = scmp.eq.s32.totalorder %s20, 1
      %p64 = por %p62, %p63
      %p66 = scmp.ne.s32.totalorder %s51, %s65
      %p67 = scmp.eq.s32.totalorder %s20, 0
      %p68 = por %p66, %p67
      %s69 = ssub.s32 %s14, %s21
      %p70 = scmp.eq.s32.totalorder %s69, 0
      %s72 = sadd.s32 %s71, 1
      %s73 = scalar_select %p70, %s71, %s72
      %p76 = pneg %p70
      %p77 = scmp.eq.s32.totalorder %s14, 1
      %p78 = por %p76, %p77
      %p79 = scmp.ne.s32.totalorder %s71, %s74
      %p80 = scmp.eq.s32.totalorder %s14, 0
      %p81 = por %p79, %p80
      %p82 = scmp.ne.s32.totalorder %s71, %s74
      %p83 = scmp.eq.s32.totalorder %s19, 1
      %p84 = por %p82, %p83
      %p85 = scmp.ne.s32.totalorder %s74, %s75
      %p86 = scmp.eq.s32.totalorder %s19, 0
      %p87 = por %p85, %p86
      %p88 = scmp.ne.s32.totalorder %s74, %s75
      %p89 = scmp.eq.s32.totalorder %s20, 1
      %p90 = por %p88, %p89
      %p92 = scmp.ne.s32.totalorder %s75, %s91
      %p93 = scmp.eq.s32.totalorder %s20, 0
      %p94 = por %p92, %p93
      %s96 = sadd.s32 %s95, 1
      %p99 = scmp.eq.s32.totalorder %s14, 1
      %p100 = scmp.ne.s32.totalorder %s95, %s97
      %p101 = scmp.eq.s32.totalorder %s14, 0
      %p102 = por %p100, %p101
      %p103 = scmp.ne.s32.totalorder %s95, %s97
      %p104 = scmp.eq.s32.totalorder %s19, 1
      %p105 = por %p103, %p104
      %p106 = scmp.ne.s32.totalorder %s97, %s98
      %p107 = scmp.eq.s32.totalorder %s19, 0
      %p108 = por %p106, %p107
      %p109 = scmp.ne.s32.totalorder %s97, %s98
      %p110 = scmp.eq.s32.totalorder %s20, 1
      %p111 = por %p109, %p110
      %p113 = scmp.ne.s32.totalorder %s98, %s112
      %p114 = scmp.eq.s32.totalorder %s20, 0
      %p115 = por %p113, %p114
      %s116 = ssub.s32 %s14, %s21
      %p117 = scmp.eq.s32.totalorder %s116, 0
      %s119 = sadd.s32 %s118, 1
      %s120 = scalar_select %p117, %s118, %s119
      %p123 = pneg %p117
      %p124 = scmp.eq.s32.totalorder %s14, 1
      %p125 = por %p123, %p124
      %p126 = scmp.ne.s32.totalorder %s118, %s121
      %p127 = scmp.eq.s32.totalorder %s14, 0
      %p128 = por %p126, %p127
      %p129 = scmp.ne.s32.totalorder %s118, %s121
      %p130 = scmp.eq.s32.totalorder %s19, 1
      %p131 = por %p129, %p130
      %p132 = scmp.ne.s32.totalorder %s121, %s122
      %p133 = scmp.eq.s32.totalorder %s19, 0
      %p134 = por %p132, %p133
      %p135 = scmp.ne.s32.totalorder %s121, %s122
      %p136 = scmp.eq.s32.totalorder %s20, 1
      %p137 = por %p135, %p136
      %p139 = scmp.ne.s32.totalorder %s122, %s138
      %p140 = scmp.eq.s32.totalorder %s20, 0
      %p141 = por %p139, %p140
      %p142 = scmp.le.s32.totalorder 1, %s14
      %p143 = scmp.lt.s32.totalorder %s14, 3
      %p144 = pnand %p142, %p143
      %p145 = pneg %p144
      // Predicated region
      $region9: #{tpu_custom_call.1} parent=5 // pred_check
        _
      $region10: #{tpu_custom_call.1} parent=5 // pred_check_branch
        %147 = sbr.rel (%p144) target = $region12
      $region11: #{tpu_custom_call.1} parent=5 // pred_region
        %s148 = ssub.s32 %s14, 1
        // Predicated region
        $region13: #{tpu_custom_call.1} parent=11 // pred_check
          %p149 = pneg %p61
        $region14: #{tpu_custom_call.1} parent=11 // pred_check_branch
          %151 = sbr.rel (%p149) target = $region16
        $region15: #{tpu_custom_call.1} parent=11 // pred_region
          _
        $region16: #{tpu_custom_call.1} parent=11 // pred_fallthru
          _
        // Predicated region
        $region17: #{tpu_custom_call.1} parent=11 // pred_check
          %p152 = pneg %p108
        $region18: #{tpu_custom_call.1} parent=11 // pred_check_branch
          %154 = sbr.rel (%p152) target = $region20
        $region19: #{tpu_custom_call.1} parent=11 // pred_region
          %156 = vsyncadd [#allocation3], 0
          %s157 = sshll.u32 %s3, 4
          %s158 = int_to_ptr.hbm [resolvable:$true] %s157
          %s159 = sshll.u32 [#allocation2], 4
          %s160 = int_to_ptr.vmem [resolvable:$true] %s159
          %165 = dma.hbm_to_vmem [thread:$0]  %s158, 512, %s160, [#allocation3], 128, 128, 8
        $region20: #{tpu_custom_call.1} parent=11 // pred_fallthru
          _
      $region12: #{tpu_custom_call.1} parent=5 // pred_fallthru
        _
      %p166 = scmp.lt.s32.totalorder %s14, 2
      // Predicated region
      $region21: #{tpu_custom_call.1} parent=5 // pred_check
        %p167 = pneg %p166
      $region22: #{tpu_custom_call.1} parent=5 // pred_check_branch
        %169 = sbr.rel (%p167) target = $region24
      $region23: #{tpu_custom_call.1} parent=5 // pred_region
        // Predicated region
        $region25: #{tpu_custom_call.1} parent=23 // pred_check
          %p170 = pneg %p34
        $region26: #{tpu_custom_call.1} parent=23 // pred_check_branch
          %172 = sbr.rel (%p170) target = $region28
        $region27: #{tpu_custom_call.1} parent=23 // pred_region
          %s173 = smul.u32 2, %s14
          %p174 = scmp.lt.s32.totalorder %s173, 3
          %s175 = scalar_select %p174, %s173, 3
          %s176 = smul.addr %s175, 8
          %s177 = scalar_lea.vmem %s0, %s176
          %s178 = smul.u32 2, %s14
        $region28: #{tpu_custom_call.1} parent=23 // pred_fallthru
          _
        // Predicated region
        $region29: #{tpu_custom_call.1} parent=23 // pred_check
          %p179 = pneg %p81
        $region30: #{tpu_custom_call.1} parent=23 // pred_check_branch
          %181 = sbr.rel (%p179) target = $region32
        $region31: #{tpu_custom_call.1} parent=23 // pred_region
          %s182 = smul.u32 2, %s14
          %p183 = scmp.lt.s32.totalorder %s182, 3
          %s184 = scalar_select %p183, %s182, 3
          %s185 = smul.addr %s184, 8
          %s186 = scalar_lea.vmem %s2, %s185
          %s187 = smul.u32 2, %s14
        $region32: #{tpu_custom_call.1} parent=23 // pred_fallthru
          _
      $region24: #{tpu_custom_call.1} parent=5 // pred_fallthru
        _
      %p188 = scmp.le.s32.totalorder 1, %s14
      %p189 = scmp.lt.s32.totalorder %s14, 3
      %p190 = pnand %p188, %p189
      %p191 = pneg %p190
      // Predicated region
      $region33: #{tpu_custom_call.1} parent=5 // pred_check
        _
      $region34: #{tpu_custom_call.1} parent=5 // pred_check_branch
        %193 = sbr.rel (%p190) target = $region36
      $region35: #{tpu_custom_call.1} parent=5 // pred_region
        %s194 = ssub.s32 %s14, 1
        // Predicated region
        $region37: #{tpu_custom_call.1} parent=35 // pred_check
          %p195 = pneg %p108
        $region38: #{tpu_custom_call.1} parent=35 // pred_check_branch
          %197 = sbr.rel (%p195) target = $region40
        $region39: #{tpu_custom_call.1} parent=35 // pred_region
          %199 = dma.done [#allocation3], 512
        $region40: #{tpu_custom_call.1} parent=35 // pred_fallthru
          _
        %s200 = smul.u32 2, %s19
        %p201 = scmp.lt.s32.totalorder %s200, 3
        %s202 = scalar_select %p201, %s200, 3
        %s203 = smul.addr %s202, 8
        %s204 = scalar_lea.vmem %s0, %s203
        %p205 = pneg %p40
        %p206 = pneg %p37
        %p207 = pneg %p61
        %p208 = pneg %p58
        %s209 = smul.u32 2, %s19
        %p210 = scmp.lt.s32.totalorder %s209, 3
        %s211 = scalar_select %p210, %s209, 3
        %s212 = smul.addr %s211, 8
        %s213 = scalar_lea.vmem %s2, %s212
        %p214 = pneg %p87
        %p215 = pneg %p84
        %p216 = pneg %p108
        %p217 = pneg %p105
        %p218 = pneg %p134
        %p219 = pneg %p131
        %s220 = sand.u32 %s121, 1
        %s221 = scalar_lea.sflag [#allocation4], %s220
        %s222 = sand.u32 %s121, 1
        %s223 = smul.addr %s222, 16
        %s224 = scalar_lea.vmem [#allocation5], %s223
        %s225 = smul.u32 2, %s19
        %p226 = scmp.lt.s32.totalorder %s225, 3
        %s227 = scalar_select %p226, %s225, 3
        %s228 = smul.addr %s227, 8
        %s229 = scalar_lea.vmem %s0, %s228
        %s230 = smul.u32 2, %s19
        %s231 = smul.u32 2, %s19
        %p232 = scmp.lt.s32.totalorder %s231, 3
        %s233 = scalar_select %p232, %s231, 3
        %s234 = smul.addr %s233, 8
        %s235 = scalar_lea.vmem %s2, %s234
        %s236 = smul.u32 2, %s19
        %s237 = smul.u32 2, %s19
        %v238 = vld [vmem:[%s235] sm:$0xff]
        %v239 = vld [vmem:[%s235 + $0x8] sm:$0xff]
        %v240 = vld [vmem:[#allocation2] sm:$0xff]
        %v241 = vld [vmem:[#allocation2 + $0x8] sm:$0xff]
        %v242 = vld [vmem:[#allocation2 + $0x10] sm:$0xff]
        %v243 = vld [vmem:[#allocation2 + $0x18] sm:$0xff]
        %244 = vmatpush.xpose.msra.mxu0 0.0
        %245 = vmatpush.xpose.msra.mxu0 0.0
        %246 = vmatpush.xpose.msra.mxu0 0.0
        %247 = vmatpush.xpose.msra.mxu0 0.0
        %248 = vmatpush.xpose.msra.mxu0 0.0
        %249 = vmatpush.xpose.msra.mxu0 0.0
        %250 = vmatpush.xpose.msra.mxu0 0.0
        %251 = vmatpush.xpose.msra.mxu0 0.0
        %252 = vmatpush.xpose.msra.mxu0 0.0
        %253 = vmatpush.xpose.msra.mxu0 0.0
        %254 = vmatpush.xpose.msra.mxu0 0.0
        %255 = vmatpush.xpose.msra.mxu0 0.0
        %256 = vmatpush.xpose.msra.mxu0 %v243
        %257 = vmatpush.xpose.msra.mxu0 %v242
        %258 = vmatpush.xpose.msra.mxu0 %v241
        %259 = vmatpush.xpose.msra.mxu0 %v240
        %260 = vmatmul.f32.gmra.mxu0 %v238
        %v261 = vpop.f32.mrf.mxu0
        %v262 = vadd.f32 0.0, %v261
        %263 = vmatmul.f32.gmra.mxu0 %v239
        %v264 = vpop.f32.mrf.mxu0
        %v265 = vadd.f32 0.0, %v264
        %266 = vdwg.mxu0
        %v267 = vld [vmem:[%s229] sm:$0xff]
        %v268 = vld [vmem:[%s229 + $0x8] sm:$0xff]
        %v269 = vmul.f32 %v262, 2.0
        %v270 = vmul.f32 %v265, 2.0
        %272 = vset.pattern.permute.xlu0 0
        %273 = vperm.xlu0 %272, %v267
        %v274 = vpop.permute.xlu0 %273
        %277 = vset.pattern.permute.xlu0 0
        %278 = vperm.xlu0 %277, %v268
        %v279 = vpop.permute.xlu0 %278
        %v281 = vsub.f32 %v274, %v269
        %v282 = vsub.f32 %v279, %v270
        %v283 = vld [vmem:[%s1] sm:$0x1]
        %v285 = vperm.slane %v283, 0
        %v287 = vadd.f32 %v281, %v285
        %v288 = vadd.f32 %v282, %v285
        %v289 = vmax.f32 %v287, 0.0
        %v290 = vmax.f32 %v288, 0.0
        %vm291 = vcmp.eq.f32.partialorder %v289, 0.0
        %vm292 = vcmp.eq.f32.partialorder %v290, 0.0
        %v293 = vsel %vm291, 1, 0
        %v294 = vsel %vm292, 1, 0
        %v295 = vcvt.s32.f32 %v293
        %v296 = vcvt.s32.f32 %v294
        %v297 = vmul.f32 %v295, 1e-16
        %v298 = vmul.f32 %v296, 1e-16
        %v299 = vadd.f32 %v289, %v297
        %v300 = vadd.f32 %v290, %v298
        %v301 = vrsqrt.pop %v299
        %v302 = vmul.f32 %v301, %v299
        %v303 = vmul.f32 %v302, %v301
        %v304 = vmul.f32 0.5, %v303
        %v305 = vsub.f32 1.5, %v304
        %v306 = vmul.f32 %v301, %v305
        %v307 = vmul.f32 %v299, %v306
        %vm308 = vcmp.eq.f32.partialorder %v299, inf
        %v309 = vsel %vm308, %v299, %v307
        %vm310 = vcmp.eq.f32.partialorder %v299, 0.0
        %v311 = vand.u32 %v299, 2147483648
        %v312 = vsel %vm310, %v311, %v309
        %v313 = vrsqrt.pop %v300
        %v314 = vmul.f32 %v313, %v300
        %v315 = vmul.f32 %v314, %v313
        %v316 = vmul.f32 0.5, %v315
        %v317 = vsub.f32 1.5, %v316
        %v318 = vmul.f32 %v313, %v317
        %v319 = vmul.f32 %v300, %v318
        %vm320 = vcmp.eq.f32.partialorder %v300, inf
        %v321 = vsel %vm320, %v300, %v319
        %vm322 = vcmp.eq.f32.partialorder %v300, 0.0
        %v323 = vand.u32 %v300, 2147483648
        %v324 = vsel %vm322, %v323, %v321
        %v325 = vsub.f32 1.0, %v295
        %v326 = vsub.f32 1.0, %v296
        %v327 = vmul.f32 %v312, %v325
        %v328 = vmul.f32 %v324, %v326
        %vm329 = vcmask 261120
        %330 = vst.msk [vmem:[%s224] sm:$0xff] %vm329, %v327
        %331 = vst.msk [vmem:[%s224 + $0x8] sm:$0xff] %vm329, %v328
        %s332 = sand.u32 %s121, 1
        %s333 = scalar_lea.sflag [#allocation4], %s332
        %s334 = sand.u32 %s121, 1
        %s335 = smul.addr %s334, 16
        %s336 = scalar_lea.vmem [#allocation5], %s335
        // Predicated region
        $region41: #{tpu_custom_call.1} parent=35 // pred_check
          %p337 = pneg %p131
        $region42: #{tpu_custom_call.1} parent=35 // pred_check_branch
          %339 = sbr.rel (%p337) target = $region44
        $region43: #{tpu_custom_call.1} parent=35 // pred_region
          %s340 = smul.u32 2, %s19
          %342 = vsyncadd %s333, 0
          %s343 = smul.addr %s340, 8
          %s344 = scalar_lea.hbm %s4, %s343
          %s345 = sshll.u32 %s336, 4
          %s346 = int_to_ptr.vmem [resolvable:$true] %s345
          %s347 = sshll.u32 %s344, 4
          %s348 = int_to_ptr.hbm [resolvable:$true] %s347
          %353 = dma.vmem_to_hbm [thread:$0]  %s346, 256, %s348, %s333, 128, 128, 8
        $region44: #{tpu_custom_call.1} parent=35 // pred_fallthru
          _
      $region36: #{tpu_custom_call.1} parent=5 // pred_fallthru
        _
      %p354 = scmp.le.s32.totalorder 2, %s14
      // Predicated region
      $region45: #{tpu_custom_call.1} parent=5 // pred_check
        %p355 = pneg %p354
      $region46: #{tpu_custom_call.1} parent=5 // pred_check_branch
        %357 = sbr.rel (%p355) target = $region48
      $region47: #{tpu_custom_call.1} parent=5 // pred_region
        %s358 = ssub.s32 %s14, 2
        // Predicated region
        $region49: #{tpu_custom_call.1} parent=47 // pred_check
          %p359 = pneg %p137
        $region50: #{tpu_custom_call.1} parent=47 // pred_check_branch
          %361 = sbr.rel (%p359) target = $region52
        $region51: #{tpu_custom_call.1} parent=47 // pred_region
          %s362 = sand.u32 %s122, 1
          %s363 = scalar_lea.sflag [#allocation4], %s362
          %s364 = sand.u32 %s122, 1
          %s365 = smul.addr %s364, 16
          %s366 = scalar_lea.vmem [#allocation5], %s365
          %368 = dma.done %s363, 256
        $region52: #{tpu_custom_call.1} parent=47 // pred_fallthru
          _
      $region48: #{tpu_custom_call.1} parent=5 // pred_fallthru
        _
    $region6: #{tpu_custom_call.1} parent=1 // loop_footer
      %s18 = sadd.s32 1, %s14
    $region7: #{tpu_custom_call.1} parent=1 // loop_footer_branch
      %13 = sbr.rel target = $region3
    $region8: #{tpu_custom_call.1} parent=1 // loop_exit
      _
    %369 = vsyncpa [#allocation3], 1
    %s370 = scalar_lea.sflag [#allocation3], 1
    %371 = vsyncpa %s370, 1
    %372 = vsyncpa [#allocation4], 1
    %s373 = scalar_lea.sflag [#allocation4], 1
    %374 = vsyncpa %s373, 1

</llo_original>
